<compile_context>
chip_gen: v5e
topology: v5e:2x2
jax: 0.10.0
libtpu: 0.0.40
codegen_flags: <defaults>
</compile_context>

<pallas_src>
import jax
import jax.numpy as jnp
from jax.experimental import pallas as pl
from jax.experimental.pallas import tpu as pltpu


def _round_up(n: int, m: int) -> int:
    return ((n + m - 1) // m) * m


def logreg_kernel(xt_ref, w_ref, b_ref, o_ref):
    # [F, TB] * [F, 1] -> VPU multiply, then sublane reduce (XLU) -> [1, TB].
    # Avoids a degenerate (1,F)x(F,TB) MXU matmul entirely.
    z = jnp.sum(xt_ref[...] * w_ref[...], axis=0, keepdims=True)
    z = z + b_ref[0, 0]  # scalar bias from SMEM; fuses into the VPU add
    # sigmoid(z) = 0.5 * (tanh(z/2) + 1): single EUP transcendental, exact.
    o_ref[...] = (0.5 * (jnp.tanh(0.5 * z) + 1.0)).astype(o_ref.dtype)


def logistic_regression(x, w, b, *, tb_cap: int = 32768):
    """x: [B, F] f32, w: [F, 1] f32, b: [1, 1] f32 -> [B, 1] f32 sigmoid probs."""
    B, F = x.shape

    # Adaptive lane-dense tile: one grid step for small B, capped at 32768
    # (F=8 f32 -> ~1 MiB/block double-buffered; fits v5e/v6e/v7x scoped VMEM).
    # NOTE(v7x): for very large B you may prefer keeping n_blocks >= 2 (even) so
    # the "parallel" axis shards across both TensorCores; with tb_cap=32768 that
    # happens automatically once B > 32768.
    tb = max(128, min(_round_up(B, 128), tb_cap))
    n_blocks = pl.cdiv(B, tb)

    # Transposed GEMV layout (lanes = batch).  No batch padding: Pallas clamps
    # the ragged last block; the out-of-bounds tail is never written back.
    x_t = x.T                      # [F, B]
    w_col = w.reshape(F, 1)        # [F, 1], VMEM-resident across the grid
    b2d = b.reshape(1, 1)          # scalar bias -> SMEM

    out = pl.pallas_call(
        logreg_kernel,
        out_shape=jax.ShapeDtypeStruct((1, B), jnp.float32),
        grid=(n_blocks,),
        in_specs=[
            # x^T stream: one (F, TB) block per grid step, default double-buffer.
            pl.BlockSpec((F, tb), lambda i: (0, i)),
            # Weight stays resident (same block every step).
            pl.BlockSpec((F, 1), lambda i: (0, 0)),
            # Bias as an SMEM scalar (no VMEM tile / DMA stream for it).
            pl.BlockSpec(memory_space=pltpu.SMEM),
        ],
        out_specs=pl.BlockSpec((1, tb), lambda i: (0, i)),
        compiler_params=pltpu.CompilerParams(
            dimension_semantics=("parallel",),  # shards across v7x's 2 TCs when n_blocks >= 2
        ),
        cost_estimate=pl.CostEstimate(
            flops=2 * B * F,
            transcendentals=B,
            bytes_accessed=4 * B * F + 4 * F + 4 * B,
        ),
    )(x_t, w_col, b2d)

    return out[0, :B].reshape(B, 1)


if __name__ == "__main__":
    # Pima-diabetes-style problem: 8 input features, 768 rows.
    # Adaptive tb -> tb=768, grid=(1,): a single lane-dense step, no padding.
    batch, in_features = 768, 8

    key = jax.random.PRNGKey(0)
    kx, kw, kb = jax.random.split(key, 3)

    x = jax.random.normal(kx, (batch, in_features), dtype=jnp.float32)
    # Deterministic "Linear(in_features, 1)" parameters (synthetic init),
    # stored pre-transposed as [F, 1] so y = x @ w + b matches torch Linear.
    w = jax.random.normal(kw, (in_features, 1), dtype=jnp.float32) * 0.1
    b = jax.random.normal(kb, (1, 1), dtype=jnp.float32) * 0.1

    out = jax.block_until_ready(logistic_regression(x, w, b))

    # Reference check (same semantics as torch Linear + sigmoid).
    ref = jax.nn.sigmoid(x @ w + b)
    assert out.shape == (batch, 1)
    assert jnp.allclose(out, ref, atol=1e-5, rtol=1e-5), "mismatch vs reference"

    print("KERNEL_OK")
</pallas_src>

<mosaic_0001>
module attributes {stable_mosaic.version = 11 : i64} {
  func.func @logreg_kernel(%arg0: i32, %arg1: memref<8x768xf32, #tpu.memory_space<vmem>>, %arg2: memref<8x1xf32, #tpu.memory_space<vmem>>, %arg3: memref<1x1xf32, #tpu.memory_space<smem>>, %arg4: memref<1x768xf32, #tpu.memory_space<vmem>>) attributes {dimension_semantics = [#tpu.dimension_semantics<parallel>], iteration_bounds = array<i64: 1>, scalar_prefetch = 0 : i64, scratch_operands = 0 : i64, tpu.core_type = #tpu.core_type<tc>, window_params = [{transform_indices = @transform_0, window_bounds = array<i64: 8, 768>}, {pipeline_mode = #tpu.pipeline_mode<synchronous>, transform_indices = @transform_1, window_bounds = array<i64: 8, 1>}, {transform_indices = @transform_2, window_bounds = array<i64: 1, 1>}, {transform_indices = @transform_3, window_bounds = array<i64: 1, 768>}]} {
    %c0 = arith.constant 0 : index
    %c0_0 = arith.constant 0 : index
    %0 = vector.load %arg1[%c0, %c0_0] : memref<8x768xf32, #tpu.memory_space<vmem>>, vector<8x768xf32>
    %c0_1 = arith.constant 0 : index
    %c0_2 = arith.constant 0 : index
    %1 = vector.load %arg2[%c0_1, %c0_2] : memref<8x1xf32, #tpu.memory_space<vmem>>, vector<8x1xf32>
    %2 = vector.broadcast %1 : vector<8x1xf32> to vector<8x768xf32>
    %3 = arith.mulf %0, %2 : vector<8x768xf32>
    %cst = arith.constant dense<0.000000e+00> : vector<768xf32>
    %4 = vector.multi_reduction <add>, %3, %cst [0] : vector<8x768xf32> to vector<768xf32>
    %5 = vector.shape_cast %4 : vector<768xf32> to vector<1x768xf32>
    %c0_3 = arith.constant 0 : index
    %c0_4 = arith.constant 0 : index
    %6 = memref.load %arg3[%c0_3, %c0_4] : memref<1x1xf32, #tpu.memory_space<smem>>
    %7 = vector.broadcast %6 : f32 to vector<1x768xf32>
    %8 = arith.addf %5, %7 : vector<1x768xf32>
    %cst_5 = arith.constant 5.000000e-01 : f32
    %9 = vector.broadcast %cst_5 : f32 to vector<1x768xf32>
    %10 = arith.mulf %9, %8 : vector<1x768xf32>
    %11 = math.tanh %10 : vector<1x768xf32>
    %cst_6 = arith.constant 1.000000e+00 : f32
    %12 = vector.broadcast %cst_6 : f32 to vector<1x768xf32>
    %13 = arith.addf %11, %12 : vector<1x768xf32>
    %cst_7 = arith.constant 5.000000e-01 : f32
    %14 = vector.broadcast %cst_7 : f32 to vector<1x768xf32>
    %15 = arith.mulf %14, %13 : vector<1x768xf32>
    %c0_8 = arith.constant 0 : index
    %c0_9 = arith.constant 0 : index
    %16 = vector.load %arg4[%c0_8, %c0_9] : memref<1x768xf32, #tpu.memory_space<vmem>>, vector<1x768xf32>
    tpu.vector_store %arg4[%c0_8, %c0_9], %15 {strides = array<i32>} : memref<1x768xf32, #tpu.memory_space<vmem>>, vector<1x768xf32>,
    return
  }
  func.func @transform_0(%arg0: i32) -> (i32, i32) {
    %c0_i32 = arith.constant 0 : i32
    %c0_i32_0 = arith.constant 0 : i32
    return %c0_i32, %arg0 : i32, i32
  }
  func.func @transform_1(%arg0: i32) -> (i32, i32) {
    %c0_i32 = arith.constant 0 : i32
    %c0_i32_0 = arith.constant 0 : i32
    %c0_i32_1 = arith.constant 0 : i32
    return %c0_i32, %c0_i32_0 : i32, i32
  }
  func.func @transform_2(%arg0: i32) -> (i32, i32) {
    %c0_i32 = arith.constant 0 : i32
    %c0_i32_0 = arith.constant 0 : i32
    %c0_i32_1 = arith.constant 0 : i32
    return %c0_i32, %c0_i32_0 : i32, i32
  }
  func.func @transform_3(%arg0: i32) -> (i32, i32) {
    %c0_i32 = arith.constant 0 : i32
    %c0_i32_0 = arith.constant 0 : i32
    return %c0_i32, %arg0 : i32, i32
  }
}

</mosaic_0001>

<llo_original>
// kernel: tpu_custom_call.1
$region0: #{tpu_custom_call.1}
  #allocation0 [shape = 'u32[]', space=smem, size = 0x4, offset = 0x4, fixed_abs, tag = 'smem constant byte address 0x4 - core index']
  #allocation1 [shape = 'u32[72,128]{1,0:T(1,128)}', space=vmem, size = 0x9000, scoped, tag = 'internal scratch']
  #allocation2 [shape = 'f32[1,1]{1,0:T(1,128)S(6)}', space=smem, size = 0x200, scoped, tag = 'scoped memory for tpu_custom_call.1']
  %s0 = inlined_call_operand.hbm [shape: f32[8,768], index: 0, kind: input, shape index: {}]
  %s1 = inlined_call_operand.vmem [shape: f32[8,1], index: 1, kind: input, shape index: {}]
  %s2 = inlined_call_operand.<no memory space> [shape: f32[1,1], index: 2, kind: input, shape index: {}]
  %s3 = inlined_call_operand.hbm [shape: f32[1,768], index: 3, kind: output, shape index: {}]
  %s4 = sld [smem:[#allocation0]]
  $region26: #{tpu_custom_call.1} parent=0
    _
  %s6 = ssub.s32 1, %s4
  %s7 = scalar_select 0, %s6, %s4
  %8 = sst [smem:[#allocation2]] %s2
  $region1: #{tpu_custom_call.1} parent=0
    #allocation3 [shape = 'u8[24576]{0}', space=vmem, size = 0x6000, scoped, tag = 'input window, operand 0, single buffered']
    #allocation4 [shape = 's32[1]{0}', space=sflag, size = 0x4, scoped, tag = 'scoped memory for tpu_custom_call.1']
    #allocation5 [shape = 's32[1]{0}', space=sflag, size = 0x4, scoped, tag = 'scoped memory for tpu_custom_call.1']
    #allocation6 [shape = 'u8[3072]{0}', space=vmem, size = 0xc00, scoped, tag = 'output window, operand 0, single buffered']
    %9 = vsyncpa [#allocation4], 0
    %10 = vsyncpa [#allocation5], 0
    // Predicated region
    $region2: #{tpu_custom_call.1} parent=1 // pred_check
      _
    $region3: #{tpu_custom_call.1} parent=1 // pred_check_branch
      %12 = sbr.rel (0) target = $region5
    $region4: #{tpu_custom_call.1} parent=1 // pred_region
      %14 = vsyncadd [#allocation4], 0
      %s16 = sshll.u32 %s0, 4
      %s17 = int_to_ptr.hbm [resolvable:$true] %s16
      %s18 = sshll.u32 [#allocation3], 4
      %s19 = int_to_ptr.vmem [resolvable:$true] %s18
      %21 = dma.hbm_to_vmem [thread:$0]  %s17, 768, %s19, [#allocation4]
    $region5: #{tpu_custom_call.1} parent=1 // pred_fallthru
      _
    // Predicated region
    $region6: #{tpu_custom_call.1} parent=1 // pred_check
      _
    $region7: #{tpu_custom_call.1} parent=1 // pred_check_branch
      %23 = sbr.rel (0) target = $region9
    $region8: #{tpu_custom_call.1} parent=1 // pred_region
      _
    $region9: #{tpu_custom_call.1} parent=1 // pred_fallthru
      _
    // Predicated region
    $region10: #{tpu_custom_call.1} parent=1 // pred_check
      _
    $region11: #{tpu_custom_call.1} parent=1 // pred_check_branch
      %25 = sbr.rel (0) target = $region13
    $region12: #{tpu_custom_call.1} parent=1 // pred_region
      _
    $region13: #{tpu_custom_call.1} parent=1 // pred_fallthru
      _
    // Predicated region
    $region14: #{tpu_custom_call.1} parent=1 // pred_check
      _
    $region15: #{tpu_custom_call.1} parent=1 // pred_check_branch
      %27 = sbr.rel (0) target = $region17
    $region16: #{tpu_custom_call.1} parent=1 // pred_region
      %29 = dma.done [#allocation4], 768
    $region17: #{tpu_custom_call.1} parent=1 // pred_fallthru
      _
    %v30 = vld [vmem:[#allocation3] sm:$0xff]
    %v31 = vld [vmem:[#allocation3 + $0x8] sm:$0xff]
    %v32 = vld [vmem:[#allocation3 + $0x10] sm:$0xff]
    %v33 = vld [vmem:[#allocation3 + $0x18] sm:$0xff]
    %v34 = vld [vmem:[#allocation3 + $0x20] sm:$0xff]
    %v35 = vld [vmem:[#allocation3 + $0x28] sm:$0xff]
    %v36 = vld [vmem:[%s1] sm:$0xff]
    %38 = vset.pattern.permute.xlu0 0
    %39 = vperm.xlu0 %38, %v36
    %v40 = vpop.permute.xlu0 %39
    %v42 = vmul.f32 %v30, %v40
    %v43 = vmul.f32 %v31, %v40
    %v44 = vmul.f32 %v32, %v40
    %v45 = vmul.f32 %v33, %v40
    %v46 = vmul.f32 %v34, %v40
    %v47 = vmul.f32 %v35, %v40
    %v48 = vrot.slane %v42, 4
    %v49 = vadd.f32 %v42, %v48
    %v50 = vrot.slane %v49, 2
    %v51 = vadd.f32 %v49, %v50
    %v52 = vrot.slane %v51, 1
    %v53 = vadd.f32 %v51, %v52
    %v54 = vrot.slane %v43, 4
    %v55 = vadd.f32 %v43, %v54
    %v56 = vrot.slane %v55, 2
    %v57 = vadd.f32 %v55, %v56
    %v58 = vrot.slane %v57, 1
    %v59 = vadd.f32 %v57, %v58
    %v60 = vrot.slane %v44, 4
    %v61 = vadd.f32 %v44, %v60
    %v62 = vrot.slane %v61, 2
    %v63 = vadd.f32 %v61, %v62
    %v64 = vrot.slane %v63, 1
    %v65 = vadd.f32 %v63, %v64
    %v66 = vrot.slane %v45, 4
    %v67 = vadd.f32 %v45, %v66
    %v68 = vrot.slane %v67, 2
    %v69 = vadd.f32 %v67, %v68
    %v70 = vrot.slane %v69, 1
    %v71 = vadd.f32 %v69, %v70
    %v72 = vrot.slane %v46, 4
    %v73 = vadd.f32 %v46, %v72
    %v74 = vrot.slane %v73, 2
    %v75 = vadd.f32 %v73, %v74
    %v76 = vrot.slane %v75, 1
    %v77 = vadd.f32 %v75, %v76
    %v78 = vrot.slane %v47, 4
    %v79 = vadd.f32 %v47, %v78
    %v80 = vrot.slane %v79, 2
    %v81 = vadd.f32 %v79, %v80
    %v82 = vrot.slane %v81, 1
    %v83 = vadd.f32 %v81, %v82
    %s84 = sld [smem:[#allocation2]]
    %v85 = vstv %s84
    %v86 = vadd.f32 %v53, %v85
    %v87 = vadd.f32 %v59, %v85
    %v88 = vadd.f32 %v65, %v85
    %v89 = vadd.f32 %v71, %v85
    %v90 = vadd.f32 %v77, %v85
    %v91 = vadd.f32 %v83, %v85
    %v92 = vmul.f32 %v86, 0.5
    %v93 = vmul.f32 %v87, 0.5
    %v94 = vmul.f32 %v88, 0.5
    %v95 = vmul.f32 %v89, 0.5
    %v96 = vmul.f32 %v90, 0.5
    %v97 = vmul.f32 %v91, 0.5
    %v98 = vtanh.pop %v92
    %v99 = vtanh.pop %v93
    %v100 = vtanh.pop %v94
    %v101 = vtanh.pop %v95
    %v102 = vtanh.pop %v96
    %v103 = vtanh.pop %v97
    %v104 = vadd.f32 %v98, 1.0
    %v105 = vadd.f32 %v99, 1.0
    %v106 = vadd.f32 %v100, 1.0
    %v107 = vadd.f32 %v101, 1.0
    %v108 = vadd.f32 %v102, 1.0
    %v109 = vadd.f32 %v103, 1.0
    %v110 = vmul.f32 %v104, 0.5
    %v111 = vmul.f32 %v105, 0.5
    %v112 = vmul.f32 %v106, 0.5
    %v113 = vmul.f32 %v107, 0.5
    %v114 = vmul.f32 %v108, 0.5
    %v115 = vmul.f32 %v109, 0.5
    %v122 = vrot.slane %v111, 7
    %v123 = vrot.slane %v112, 6
    %v124 = vrot.slane %v113, 5
    %v125 = vrot.slane %v114, 4
    %v126 = vrot.slane %v115, 3
    %vm127 = vcmask 1040384
    %v128 = vsel %vm127, %v110, %v122
    %vm129 = vcmask 1041408
    %v130 = vsel %vm129, %v128, %v123
    %vm131 = vcmask 1043459
    %v132 = vsel %vm131, %v124, %v125
    %vm133 = vcmask 1044483
    %v134 = vsel %vm133, %v132, %v126
    %vm135 = vcmask 1042432
    %v136 = vsel %vm135, %v130, %v134
    %v138 = vlaneseq
    %vm139 = vcmp.ge.s32.totalorder %v138, 0
    %vm140 = vcmp.lt.s32.totalorder %v138, 768
    %vm141 = vmand %vm139, %vm140
    %142 = vst.msk [vmem:[#allocation6] sm:$0x3f] %vm141, %v136
    // Predicated region
    $region18: #{tpu_custom_call.1} parent=1 // pred_check
      _
    $region19: #{tpu_custom_call.1} parent=1 // pred_check_branch
      %144 = sbr.rel (0) target = $region21
    $region20: #{tpu_custom_call.1} parent=1 // pred_region
      %146 = vsyncadd [#allocation5], 0
      %s148 = sshll.u32 [#allocation6], 4
      %s149 = int_to_ptr.vmem [resolvable:$true] %s148
      %s150 = sshll.u32 %s3, 4
      %s151 = int_to_ptr.hbm [resolvable:$true] %s150
      %153 = dma.vmem_to_hbm [thread:$0]  %s149, 96, %s151, [#allocation5]
    $region21: #{tpu_custom_call.1} parent=1 // pred_fallthru
      _
    // Predicated region
    $region22: #{tpu_custom_call.1} parent=1 // pred_check
      _
    $region23: #{tpu_custom_call.1} parent=1 // pred_check_branch
      %155 = sbr.rel (0) target = $region25
    $region24: #{tpu_custom_call.1} parent=1 // pred_region
      %157 = dma.done [#allocation5], 96
    $region25: #{tpu_custom_call.1} parent=1 // pred_fallthru
      _
    %158 = vsyncpa [#allocation4], 1
    %159 = vsyncpa [#allocation5], 1

</llo_original>
